<compile_context>
chip_gen: v6e
topology: v6e:2x2x1
jax: 0.10.0
libtpu: 0.0.40
codegen_flags: <defaults>
</compile_context>

<pallas_src>
import math
from functools import partial

import jax
import jax.numpy as jnp
from jax.experimental import pallas as pl
from jax.experimental.pallas import tpu as pltpu


def layernorm_kernel(x_ref, alpha_ref, beta_ref, o_ref, *, eps, d_model):
    # x_ref: (block_rows, d_model); alpha_ref/beta_ref: (1, d_model)
    x = x_ref[...].astype(jnp.float32)           # load once, reuse below
    alpha = alpha_ref[...].astype(jnp.float32)   # hoisted casts (once per step)
    beta = beta_ref[...].astype(jnp.float32)

    inv_d = jnp.float32(1.0 / d_model)
    # unbiased variance (ddof=1), matching torch.Tensor.std default
    inv_dm1 = jnp.float32(1.0 / (d_model - 1)) if d_model > 1 else jnp.float32(1.0)

    mean = jnp.sum(x, axis=-1, keepdims=True) * inv_d        # (rows, 1)
    diff = x - mean
    var = jnp.sum(diff * diff, axis=-1, keepdims=True) * inv_dm1
    std = jnp.sqrt(var)

    # exact per-row reciprocal on the (rows, 1) column, then broadcast-multiply
    inv = 1.0 / (std + jnp.float32(eps))

    o_ref[...] = (diff * inv * alpha + beta).astype(o_ref.dtype)


def _choose_block_rows(rows, d_model, itemsize):
    """Largest row tile whose double-buffered in+out working set fits ~32 MiB."""
    budget_bytes = 32 * 1024 * 1024
    # 2 arrays (in + out) * 2 pipeline buffers * d_model * bytes-per-elem
    bytes_per_row = 4 * d_model * max(int(itemsize), 4)
    br = budget_bytes // max(bytes_per_row, 1)
    br = max(8, min(1024, br))
    br = (br // 8) * 8                       # sublane-aligned
    rows_rounded = ((rows + 7) // 8) * 8     # don't allocate beyond the data
    return int(min(br, max(8, rows_rounded)))


def layer_normalization(x, alpha, beta, eps=1e-6, block_rows=None):
    """x: (..., d_model); alpha, beta: (d_model,)"""
    orig_shape = x.shape
    d_model = orig_shape[-1]
    rows = int(math.prod(orig_shape[:-1])) if len(orig_shape) > 1 else 1
    x2 = x.reshape(rows, d_model)

    if block_rows is None:
        block_rows = _choose_block_rows(rows, d_model, jnp.dtype(x.dtype).itemsize)

    alpha2 = alpha.reshape(1, d_model)
    beta2 = beta.reshape(1, d_model)

    kernel = partial(layernorm_kernel, eps=eps, d_model=d_model)

    out = pl.pallas_call(
        kernel,
        out_shape=jax.ShapeDtypeStruct((rows, d_model), x.dtype),
        grid_spec=pltpu.PrefetchScalarGridSpec(
            num_scalar_prefetch=0,
            grid=(pl.cdiv(rows, block_rows),),   # partial last block is masked
            in_specs=[
                pl.BlockSpec((block_rows, d_model), lambda i: (i, 0)),
                pl.BlockSpec((1, d_model), lambda i: (0, 0)),
                pl.BlockSpec((1, d_model), lambda i: (0, 0)),
            ],
            out_specs=pl.BlockSpec((block_rows, d_model), lambda i: (i, 0)),
        ),
        compiler_params=pltpu.CompilerParams(
            dimension_semantics=("parallel",),
            vmem_limit_bytes=48 * 1024 * 1024,
        ),
    )(x2, alpha2, beta2)

    return out.reshape(orig_shape)


if __name__ == "__main__":
    key = jax.random.PRNGKey(0)
    batch, seq, d_model = 2, 8, 32
    x = jax.random.normal(key, (batch, seq, d_model), dtype=jnp.float32)

    # deterministic parameter init, matching the PyTorch module's __init__
    alpha = jnp.ones((d_model,), dtype=jnp.float32)
    beta = jnp.zeros((d_model,), dtype=jnp.float32)
    eps = 1e-6

    out = layer_normalization(x, alpha, beta, eps=eps)
    out = jax.block_until_ready(out)

    # reference (pure JAX, mirrors PyTorch: unbiased std, eps added to std)
    mean = jnp.mean(x, axis=-1, keepdims=True)
    std = jnp.sqrt(
        jnp.sum((x - mean) ** 2, axis=-1, keepdims=True) / (d_model - 1)
    )
    ref = alpha * (x - mean) / (std + eps) + beta
    assert jnp.allclose(out, ref, atol=1e-5, rtol=1e-5), "mismatch vs reference"

    print("KERNEL_OK")
</pallas_src>

<mosaic_0001>
module attributes {stable_mosaic.version = 11 : i64} {
  func.func @layernorm_kernel(%arg0: i32, %arg1: memref<16x32xf32, #tpu.memory_space<vmem>>, %arg2: memref<1x32xf32, #tpu.memory_space<vmem>>, %arg3: memref<1x32xf32, #tpu.memory_space<vmem>>, %arg4: memref<16x32xf32, #tpu.memory_space<vmem>>) attributes {dimension_semantics = [#tpu.dimension_semantics<parallel>], iteration_bounds = array<i64: 1>, scalar_prefetch = 0 : i64, scratch_operands = 0 : i64, tpu.core_type = #tpu.core_type<tc>, window_params = [{transform_indices = @transform_0, window_bounds = array<i64: 16, 32>}, {pipeline_mode = #tpu.pipeline_mode<synchronous>, transform_indices = @transform_1, window_bounds = array<i64: 1, 32>}, {pipeline_mode = #tpu.pipeline_mode<synchronous>, transform_indices = @transform_2, window_bounds = array<i64: 1, 32>}, {transform_indices = @transform_3, window_bounds = array<i64: 16, 32>}]} {
    %c0 = arith.constant 0 : index
    %c0_0 = arith.constant 0 : index
    %0 = vector.load %arg1[%c0, %c0_0] : memref<16x32xf32, #tpu.memory_space<vmem>>, vector<16x32xf32>
    %c0_1 = arith.constant 0 : index
    %c0_2 = arith.constant 0 : index
    %1 = vector.load %arg2[%c0_1, %c0_2] : memref<1x32xf32, #tpu.memory_space<vmem>>, vector<1x32xf32>
    %c0_3 = arith.constant 0 : index
    %c0_4 = arith.constant 0 : index
    %2 = vector.load %arg3[%c0_3, %c0_4] : memref<1x32xf32, #tpu.memory_space<vmem>>, vector<1x32xf32>
    %cst = arith.constant dense<0.000000e+00> : vector<16xf32>
    %3 = vector.multi_reduction <add>, %0, %cst [1] : vector<16x32xf32> to vector<16xf32>
    %4 = vector.shape_cast %3 : vector<16xf32> to vector<16x1xf32>
    %cst_5 = arith.constant 3.125000e-02 : f32
    %5 = vector.broadcast %cst_5 : f32 to vector<16x1xf32>
    %6 = arith.mulf %4, %5 : vector<16x1xf32>
    %7 = vector.broadcast %6 : vector<16x1xf32> to vector<16x32xf32>
    %8 = arith.subf %0, %7 : vector<16x32xf32>
    %9 = arith.mulf %8, %8 : vector<16x32xf32>
    %cst_6 = arith.constant dense<0.000000e+00> : vector<16xf32>
    %10 = vector.multi_reduction <add>, %9, %cst_6 [1] : vector<16x32xf32> to vector<16xf32>
    %11 = vector.shape_cast %10 : vector<16xf32> to vector<16x1xf32>
    %cst_7 = arith.constant 0.0322580636 : f32
    %12 = vector.broadcast %cst_7 : f32 to vector<16x1xf32>
    %13 = arith.mulf %11, %12 : vector<16x1xf32>
    %14 = math.sqrt %13 : vector<16x1xf32>
    %cst_8 = arith.constant 9.99999997E-7 : f32
    %15 = vector.broadcast %cst_8 : f32 to vector<16x1xf32>
    %16 = arith.addf %14, %15 : vector<16x1xf32>
    %cst_9 = arith.constant 1.000000e+00 : f32
    %17 = vector.broadcast %cst_9 : f32 to vector<16x1xf32>
    %18 = arith.divf %17, %16 : vector<16x1xf32>
    %19 = vector.broadcast %18 : vector<16x1xf32> to vector<16x32xf32>
    %20 = arith.mulf %8, %19 : vector<16x32xf32>
    %21 = vector.broadcast %1 : vector<1x32xf32> to vector<16x32xf32>
    %22 = arith.mulf %20, %21 : vector<16x32xf32>
    %23 = vector.broadcast %2 : vector<1x32xf32> to vector<16x32xf32>
    %24 = arith.addf %22, %23 : vector<16x32xf32>
    %c0_10 = arith.constant 0 : index
    %c0_11 = arith.constant 0 : index
    %25 = vector.load %arg4[%c0_10, %c0_11] : memref<16x32xf32, #tpu.memory_space<vmem>>, vector<16x32xf32>
    tpu.vector_store %arg4[%c0_10, %c0_11], %24 {strides = array<i32>} : memref<16x32xf32, #tpu.memory_space<vmem>>, vector<16x32xf32>,
    return
  }
  func.func @transform_0(%arg0: i32) -> (i32, i32) {
    %c0_i32 = arith.constant 0 : i32
    %c0_i32_0 = arith.constant 0 : i32
    return %arg0, %c0_i32 : i32, i32
  }
  func.func @transform_1(%arg0: i32) -> (i32, i32) {
    %c0_i32 = arith.constant 0 : i32
    %c0_i32_0 = arith.constant 0 : i32
    %c0_i32_1 = arith.constant 0 : i32
    return %c0_i32, %c0_i32_0 : i32, i32
  }
  func.func @transform_2(%arg0: i32) -> (i32, i32) {
    %c0_i32 = arith.constant 0 : i32
    %c0_i32_0 = arith.constant 0 : i32
    %c0_i32_1 = arith.constant 0 : i32
    return %c0_i32, %c0_i32_0 : i32, i32
  }
  func.func @transform_3(%arg0: i32) -> (i32, i32) {
    %c0_i32 = arith.constant 0 : i32
    %c0_i32_0 = arith.constant 0 : i32
    return %arg0, %c0_i32 : i32, i32
  }
}

</mosaic_0001>

<llo_original>
// kernel: tpu_custom_call.1
$region0: #{tpu_custom_call.1}
  #allocation0 [shape = 'u32[]', space=smem, size = 0x4, offset = 0x4, fixed_abs, tag = 'smem constant byte address 0x4 - core index']
  #allocation1 [shape = 'u32[144,128]{1,0:T(1,128)}', space=vmem, size = 0x12000, scoped, tag = 'internal scratch']
  %s0 = inlined_call_operand.hbm [shape: f32[16,32], index: 0, kind: input, shape index: {}]
  %s1 = inlined_call_operand.vmem [shape: f32[1,32], index: 1, kind: input, shape index: {}]
  %s2 = inlined_call_operand.vmem [shape: f32[1,32], index: 2, kind: input, shape index: {}]
  %s3 = inlined_call_operand.hbm [shape: f32[16,32], index: 3, kind: output, shape index: {}]
  %s4 = sld [smem:[#allocation0]]
  $region26: #{tpu_custom_call.1} parent=0
    _
  %s6 = ssub.s32 1, %s4
  %s7 = scalar_select 0, %s6, %s4
  $region1: #{tpu_custom_call.1} parent=0
    #allocation2 [shape = 'u8[8192]{0}', space=vmem, size = 0x2000, scoped, tag = 'input window, operand 0, single buffered']
    #allocation3 [shape = 's32[1]{0}', space=sflag, size = 0x4, scoped, tag = 'scoped memory for tpu_custom_call.1']
    #allocation4 [shape = 's32[1]{0}', space=sflag, size = 0x4, scoped, tag = 'scoped memory for tpu_custom_call.1']
    #allocation5 [shape = 'u8[8192]{0}', space=vmem, size = 0x2000, scoped, tag = 'output window, operand 0, single buffered']
    %8 = vsyncpa [#allocation3], 0
    %9 = vsyncpa [#allocation4], 0
    // Predicated region
    $region2: #{tpu_custom_call.1} parent=1 // pred_check
      _
    $region3: #{tpu_custom_call.1} parent=1 // pred_check_branch
      %11 = sbr.rel (0) target = $region5
    $region4: #{tpu_custom_call.1} parent=1 // pred_region
      %s13 = ssub.s32 256, 256
      %14 = vsyncadd [#allocation3], %s13
      %s15 = sshll.u32 [#allocation2], 4
      %s16 = int_to_ptr.vmem [resolvable:$true] %s15
      %21 = dma.hbm_to_vmem [thread:$0]  %s0, 256, %s16, [#allocation3], 128, 128, 8
    $region5: #{tpu_custom_call.1} parent=1 // pred_fallthru
      _
    // Predicated region
    $region6: #{tpu_custom_call.1} parent=1 // pred_check
      _
    $region7: #{tpu_custom_call.1} parent=1 // pred_check_branch
      %23 = sbr.rel (0) target = $region9
    $region8: #{tpu_custom_call.1} parent=1 // pred_region
      _
    $region9: #{tpu_custom_call.1} parent=1 // pred_fallthru
      _
    // Predicated region
    $region10: #{tpu_custom_call.1} parent=1 // pred_check
      _
    $region11: #{tpu_custom_call.1} parent=1 // pred_check_branch
      %25 = sbr.rel (0) target = $region13
    $region12: #{tpu_custom_call.1} parent=1 // pred_region
      _
    $region13: #{tpu_custom_call.1} parent=1 // pred_fallthru
      _
    // Predicated region
    $region14: #{tpu_custom_call.1} parent=1 // pred_check
      _
    $region15: #{tpu_custom_call.1} parent=1 // pred_check_branch
      %27 = sbr.rel (0) target = $region17
    $region16: #{tpu_custom_call.1} parent=1 // pred_region
      %28 = dma.done [#allocation3], 256
    $region17: #{tpu_custom_call.1} parent=1 // pred_fallthru
      _
    %v29 = vld [vmem:[#allocation2] sm:$0xff]
    %v30 = vld [vmem:[#allocation2 + $0x8] sm:$0xff]
    %v31 = vld [vmem:[%s1] sm:$0x1]
    %v32 = vld [vmem:[%s2] sm:$0x1]
    %vm33 = vcmask 261120
    %v34 = vsel %vm33, %v29, 0.0
    %35 = vadd.xlane.f32.xlu0 %v34
    %v36 = vpop.xlane.xlu0 %35
    %v37 = vsel %vm33, %v30, 0.0
    %38 = vadd.xlane.f32.xlu0 %v37
    %v39 = vpop.xlane.xlu0 %38
    %v40 = vmul.f32 %v36, 0.03125
    %v41 = vmul.f32 %v39, 0.03125
    %v42 = vsub.f32 %v29, %v40
    %v43 = vsub.f32 %v30, %v41
    %v44 = vmul.f32 %v42, %v42
    %v45 = vmul.f32 %v43, %v43
    %v46 = vsel %vm33, %v44, 0.0
    %47 = vadd.xlane.f32.xlu0 %v46
    %v48 = vpop.xlane.xlu0 %47
    %v49 = vsel %vm33, %v45, 0.0
    %50 = vadd.xlane.f32.xlu0 %v49
    %v51 = vpop.xlane.xlu0 %50
    %v52 = vmul.f32 %v48, 0.032258064
    %v53 = vmul.f32 %v51, 0.032258064
    %v54 = vrsqrt.pop %v52
    %v55 = vmul.f32 %v52, %v54
    %vm56 = vcmp.eq.f32.partialorder %v52, inf
    %v57 = vsel %vm56, %v52, %v55
    %vm58 = vcmp.eq.f32.partialorder %v52, 0.0
    %v59 = vand.u32 %v52, 2147483648
    %v60 = vsel %vm58, %v59, %v57
    %v61 = vrsqrt.pop %v53
    %v62 = vmul.f32 %v53, %v61
    %vm63 = vcmp.eq.f32.partialorder %v53, inf
    %v64 = vsel %vm63, %v53, %v62
    %vm65 = vcmp.eq.f32.partialorder %v53, 0.0
    %v66 = vand.u32 %v53, 2147483648
    %v67 = vsel %vm65, %v66, %v64
    %v68 = vadd.f32 %v60, 1e-06
    %v69 = vadd.f32 %v67, 1e-06
    %v70 = vrcp.pop %v68
    %v71 = vmul.f32 1.0, %v70
    %v72 = vrcp.pop %v69
    %v73 = vmul.f32 1.0, %v72
    %v74 = vmul.f32 %v42, %v71
    %v75 = vmul.f32 %v43, %v73
    %v77 = vlaneseq
    %v78 = vshrl.u32 %v77, 7
    %v79 = vsub.s32 0, %v78
    %v80 = vrot.slane %v31, %v79
    %v82 = vmul.f32 %v74, %v80
    %v83 = vmul.f32 %v75, %v80
    %v85 = vlaneseq
    %v86 = vshrl.u32 %v85, 7
    %v87 = vsub.s32 0, %v86
    %v88 = vrot.slane %v32, %v87
    %v90 = vadd.f32 %v82, %v88
    %v91 = vadd.f32 %v83, %v88
    %92 = vst.msk [vmem:[#allocation5] sm:$0xff] %vm33, %v90
    %93 = vst.msk [vmem:[#allocation5 + $0x8] sm:$0xff] %vm33, %v91
    // Predicated region
    $region18: #{tpu_custom_call.1} parent=1 // pred_check
      _
    $region19: #{tpu_custom_call.1} parent=1 // pred_check_branch
      %95 = sbr.rel (0) target = $region21
    $region20: #{tpu_custom_call.1} parent=1 // pred_region
      %s97 = ssub.s32 256, 256
      %98 = vsyncadd [#allocation4], %s97
      %s99 = sshll.u32 [#allocation5], 4
      %s100 = int_to_ptr.vmem [resolvable:$true] %s99
      %105 = dma.vmem_to_hbm [thread:$0]  %s100, 256, %s3, [#allocation4], 128, 128, 8
    $region21: #{tpu_custom_call.1} parent=1 // pred_fallthru
      _
    // Predicated region
    $region22: #{tpu_custom_call.1} parent=1 // pred_check
      _
    $region23: #{tpu_custom_call.1} parent=1 // pred_check_branch
      %107 = sbr.rel (0) target = $region25
    $region24: #{tpu_custom_call.1} parent=1 // pred_region
      %108 = dma.done [#allocation4], 256
    $region25: #{tpu_custom_call.1} parent=1 // pred_fallthru
      _
    %109 = vsyncpa [#allocation3], 1
    %110 = vsyncpa [#allocation4], 1

</llo_original>
